<compile_context>
chip_gen: v6e
topology: v6e:2x2x1
jax: 0.10.0
libtpu: 0.0.40
codegen_flags: <defaults>
</compile_context>

<pallas_src>
import functools
from typing import NamedTuple

import jax
import jax.numpy as jnp
from jax import lax
from jax.experimental import pallas as pl
from jax.experimental.pallas import tpu as pltpu

_LANE = 128
_VMEM_WORKING_SET_BUDGET = 40 * 2**20   # v7x-safe (64 MiB physical per TC)
_MAX_H_CHUNK = 512                      # bounds the f32 (tm, h_chunk) intermediate

# One-time probe result for pipeline_mode=pl.Buffered(1) support.
_SINGLE_BUFFER_OK = None


def _round_up(x, m):
    return (x + m - 1) // m * m


def _sublane_multiple(dtype):
    # Packed sublane tile: f32 -> 8, bf16 -> 16, int8/fp8 -> 32.
    return {4: 8, 2: 16, 1: 32}[jnp.dtype(dtype).itemsize]


def _pick_h_chunk(H_p):
    if H_p <= _MAX_H_CHUNK:
        return H_p
    for c in range(_MAX_H_CHUNK, 0, -_LANE):
        if H_p % c == 0:
            return c
    return _LANE


class PipelineParams(NamedTuple):
    """Padded, pre-cast parameters (built once, reused every forward)."""
    w1_p: jax.Array   # (D_in_p, H_p)    compute_dtype
    b1_p: jax.Array   # (1, H_p)         f32
    w2_p: jax.Array   # (H_p, D_out_p)   compute_dtype
    b2_p: jax.Array   # (1, D_out_p)     f32
    d_in: int
    hidden: int
    d_out: int


def prepare_pipeline_params(w1, b1, w2, b2, *, compute_dtype=jnp.bfloat16):
    """Pad feature dims to lane multiples (128) and cast weights to the MXU
    input dtype ONCE. Zero padding is exact: padded X cols hit zero W1 rows,
    padded hidden cols are tanh(0)=0 and hit zero W2 rows."""
    D_in, H = w1.shape
    D_out = w2.shape[1]
    D_in_p, H_p, D_out_p = (_round_up(d, _LANE) for d in (D_in, H, D_out))
    w1_p = jnp.zeros((D_in_p, H_p), compute_dtype).at[:D_in, :H].set(
        w1.astype(compute_dtype))
    b1_p = jnp.zeros((1, H_p), jnp.float32).at[:, :H].set(
        b1.astype(jnp.float32).reshape(1, H))
    w2_p = jnp.zeros((H_p, D_out_p), compute_dtype).at[:H, :D_out].set(
        w2.astype(compute_dtype))
    b2_p = jnp.zeros((1, D_out_p), jnp.float32).at[:, :D_out].set(
        b2.astype(jnp.float32).reshape(1, D_out))
    return PipelineParams(w1_p, b1_p, w2_p, b2_p, D_in, H, D_out)


def _pipeline_kernel(x_ref, w1_ref, b1_ref, w2_ref, b2_ref, o_ref,
                     *, h_chunk, n_chunks):
    """Fused Linear->tanh->Linear on one (tm, D_in_p) row tile.
    f32 accumulation, f32 bias add, f32 tanh; MXU inputs in compute_dtype."""
    x = x_ref[...]
    if n_chunks == 1:
        h = jnp.tanh(
            jnp.dot(x, w1_ref[...], preferred_element_type=jnp.float32)
            + b1_ref[...])
        y = jnp.dot(h.astype(w2_ref.dtype), w2_ref[...],
                    preferred_element_type=jnp.float32)
    else:
        # Chunk the hidden dim so the f32 intermediate stays (tm, h_chunk).
        def body(c, acc):
            off = pl.multiple_of(c * h_chunk, h_chunk)
            h = jnp.tanh(
                jnp.dot(x, w1_ref[:, pl.ds(off, h_chunk)],
                        preferred_element_type=jnp.float32)
                + b1_ref[:, pl.ds(off, h_chunk)])
            return acc + jnp.dot(h.astype(w2_ref.dtype),
                                 w2_ref[pl.ds(off, h_chunk), :],
                                 preferred_element_type=jnp.float32)
        y = lax.fori_loop(0, n_chunks, body,
                          jnp.zeros(o_ref.shape, jnp.float32),
                          unroll=n_chunks <= 4)
    o_ref[...] = (y + b2_ref[...]).astype(o_ref.dtype)


def _pallas_forward(x_p, params, tm, grid_steps, h_chunk, n_chunks,
                    out_dtype, single_buffer, vmem_limit_bytes):
    D_in_p, H_p = params.w1_p.shape
    D_out_p = params.w2_p.shape[1]
    N_p = x_p.shape[0]

    def w_spec(shape):
        # Grid-invariant block: constant index map; single-buffer if supported.
        if single_buffer:
            return pl.BlockSpec(shape, lambda i: (0, 0),
                                pipeline_mode=pl.Buffered(1))
        return pl.BlockSpec(shape, lambda i: (0, 0))

    kernel = functools.partial(_pipeline_kernel, h_chunk=h_chunk,
                               n_chunks=n_chunks)
    flops = 2 * N_p * (D_in_p * H_p + H_p * D_out_p)
    bytes_accessed = (
        x_p.size * x_p.dtype.itemsize
        + params.w1_p.size * params.w1_p.dtype.itemsize
        + params.w2_p.size * params.w2_p.dtype.itemsize
        + (H_p + D_out_p) * 4
        + N_p * D_out_p * jnp.dtype(out_dtype).itemsize)

    return pl.pallas_call(
        kernel,
        out_shape=jax.ShapeDtypeStruct((N_p, D_out_p), out_dtype),
        grid_spec=pltpu.PrefetchScalarGridSpec(
            num_scalar_prefetch=0,
            grid=(grid_steps,),
            in_specs=[
                # X: tile rows, full lane-dense feature dim (double-buffered).
                pl.BlockSpec((tm, D_in_p), lambda i: (i, 0)),
                # Weights / biases: VMEM-resident across the whole grid.
                w_spec((D_in_p, H_p)),
                w_spec((1, H_p)),
                w_spec((H_p, D_out_p)),
                w_spec((1, D_out_p)),
            ],
            out_specs=pl.BlockSpec((tm, D_out_p), lambda i: (i, 0)),
        ),
        compiler_params=pltpu.CompilerParams(
            # Row tiles are independent. TODO(synk): use pltpu.CORE_PARALLEL /
            # pl.core_map to actually split row tiles across v7x's 2 TCs.
            dimension_semantics=("parallel",),
            vmem_limit_bytes=vmem_limit_bytes,
        ),
        cost_estimate=pl.CostEstimate(
            flops=flops, transcendentals=N_p * H_p,
            bytes_accessed=bytes_accessed),
    )(x_p, params.w1_p, params.b1_p, params.w2_p, params.b2_p)


def torch_pipeline_forward(x, params: PipelineParams, *, tm=512,
                           force_pallas=False):
    """Fused two-stage dense pipeline. Params must come from
    prepare_pipeline_params (padded once, outside the per-call path)."""
    global _SINGLE_BUFFER_OK
    orig_dtype = x.dtype
    N, D_in = x.shape
    assert D_in == params.d_in, "input feature dim mismatch"
    compute_dtype = params.w1_p.dtype
    D_in_p, H_p = params.w1_p.shape
    D_out_p = params.w2_p.shape[1]

    sub = _sublane_multiple(compute_dtype)
    itemsize = jnp.dtype(compute_dtype).itemsize
    h_chunk = _pick_h_chunk(H_p)
    n_chunks = H_p // h_chunk

    # Row tile: large for throughput, capped for tiny batches, rounded to the
    # packed sublane multiple, shrunk to fit the (v7x-safe) VMEM budget.
    tm_eff = min(_round_up(max(tm, sub), sub), _round_up(N, sub))
    weight_bytes = (D_in_p * H_p + H_p * D_out_p) * itemsize + (H_p + D_out_p) * 4
    if _SINGLE_BUFFER_OK is False:
        weight_bytes *= 2   # default double-buffering

    def working_set(t):
        x_buf = 2 * t * D_in_p * itemsize                       # double-buffered X
        o_buf = 2 * t * D_out_p * jnp.dtype(orig_dtype).itemsize  # double-buffered out
        interm = t * h_chunk * 4 + t * D_out_p * 4               # f32 h chunk + acc
        return weight_bytes + x_buf + o_buf + interm

    while tm_eff > sub and working_set(tm_eff) > _VMEM_WORKING_SET_BUDGET:
        tm_eff = max(sub, _round_up(tm_eff // 2, sub))

    N_p = _round_up(N, tm_eff)
    grid_steps = N_p // tm_eff

    # Tiny-problem guard: a single fully-padded tile is pure launch/DMA
    # overhead with 8-64x inflated FLOPs — plain XLA wins there.
    true_flops = 2 * N * (D_in * params.hidden + params.hidden * params.d_out)
    padded_flops = 2 * N_p * (D_in_p * H_p + H_p * D_out_p)
    if (not force_pallas) and grid_steps == 1 and padded_flops > 8 * true_flops:
        h = jnp.tanh(
            jnp.dot(x.astype(compute_dtype),
                    params.w1_p[:D_in, :params.hidden],
                    preferred_element_type=jnp.float32)
            + params.b1_p[:, :params.hidden])
        y = jnp.dot(h.astype(compute_dtype),
                    params.w2_p[:params.hidden, :params.d_out],
                    preferred_element_type=jnp.float32) + params.b2_p[:, :params.d_out]
        return y.astype(orig_dtype)

    # Per-call work: only X is padded/cast.
    x_p = jnp.zeros((N_p, D_in_p), compute_dtype).at[:N, :D_in].set(
        x.astype(compute_dtype))

    need = working_set(tm_eff)
    vmem_limit = None
    if need > 30 * 2**20:
        vmem_limit = int(min(64 * 2**20, need + need // 4))
    # TODO(synk): if the weights alone ever exceed the VMEM budget (huge H on
    # v7x), stream W1/W2 H-chunks via pltpu.emit_pipeline instead of keeping
    # them fully resident.

    attempts = [True, False] if _SINGLE_BUFFER_OK is None else [_SINGLE_BUFFER_OK]
    last_err = None
    for sb in attempts:
        try:
            out_p = _pallas_forward(x_p, params, tm_eff, grid_steps, h_chunk,
                                    n_chunks, orig_dtype, sb, vmem_limit)
            if _SINGLE_BUFFER_OK is None:
                out_p = jax.block_until_ready(out_p)  # surface lowering errors
            _SINGLE_BUFFER_OK = sb
            return out_p[:N, :params.d_out]
        except Exception as e:   # noqa: BLE001 - probe for Buffered(1) support
            last_err = e
    raise last_err


def reference_forward(x, w1, b1, w2, b2, compute_dtype=jnp.float32):
    """Pure-JAX reference mirroring the kernel's numerics: inputs/weights
    quantized to compute_dtype, f32 accumulation, f32 bias + tanh."""
    def cast(a):
        return a.astype(compute_dtype).astype(jnp.float32)
    h = jnp.tanh(jnp.dot(cast(x), cast(w1), precision=lax.Precision.HIGHEST)
                 + b1.astype(jnp.float32))
    y = jnp.dot(cast(h), cast(w2), precision=lax.Precision.HIGHEST)
    return y + b2.astype(jnp.float32)


if __name__ == "__main__":
    key = jax.random.PRNGKey(0)
    kx1, kx2, kw1, kb1, kw2, kb2 = jax.random.split(key, 6)

    # ---- small shapes (match the original toy pipeline) ----
    N_s, D_in_s, H_s, D_out_s = 16, 32, 64, 16
    x_s = jax.random.normal(kx1, (N_s, D_in_s), dtype=jnp.float32)
    w1_s = jax.random.normal(kw1, (D_in_s, H_s), dtype=jnp.float32) * 0.1
    b1_s = jax.random.normal(kb1, (1, H_s), dtype=jnp.float32) * 0.1
    w2_s = jax.random.normal(kw2, (H_s, D_out_s), dtype=jnp.float32) * 0.1
    b2_s = jax.random.normal(kb2, (1, D_out_s), dtype=jnp.float32) * 0.1

    # f32 MXU-input path (force the Pallas kernel even at this tiny size).
    p_f32 = prepare_pipeline_params(w1_s, b1_s, w2_s, b2_s,
                                    compute_dtype=jnp.float32)
    out = jax.block_until_ready(
        torch_pipeline_forward(x_s, p_f32, force_pallas=True))
    ref = reference_forward(x_s, w1_s, b1_s, w2_s, b2_s, jnp.float32)
    assert out.shape == (N_s, D_out_s)
    assert jnp.allclose(out, ref, atol=1e-2, rtol=1e-2), "small f32 mismatch"

    # bf16 MXU-input path (default), checked against a bf16-quantized reference.
    p_bf16 = prepare_pipeline_params(w1_s, b1_s, w2_s, b2_s)
    out_bf = jax.block_until_ready(
        torch_pipeline_forward(x_s, p_bf16, force_pallas=True))
    ref_bf = reference_forward(x_s, w1_s, b1_s, w2_s, b2_s, jnp.bfloat16)
    assert jnp.allclose(out_bf, ref_bf, atol=5e-3, rtol=5e-3), "small bf16 mismatch"

    # Tiny-shape auto-fallback (plain XLA path) stays numerically consistent.
    out_fb = jax.block_until_ready(torch_pipeline_forward(x_s, p_bf16))
    assert jnp.allclose(out_fb, ref_bf, atol=5e-3, rtol=5e-3), "fallback mismatch"

    # ---- medium shapes: exercise row tiling (grid > 1) and H-chunking ----
    N_m, D_in_m, H_m, D_out_m = 1024, 256, 1024, 128
    kx3, kw3, kb3, kw4, kb4 = jax.random.split(kx2, 5)
    x_m = jax.random.normal(kx3, (N_m, D_in_m), dtype=jnp.float32)
    w1_m = jax.random.normal(kw3, (D_in_m, H_m), dtype=jnp.float32) * 0.05
    b1_m = jax.random.normal(kb3, (1, H_m), dtype=jnp.float32) * 0.1
    w2_m = jax.random.normal(kw4, (H_m, D_out_m), dtype=jnp.float32) * 0.05
    b2_m = jax.random.normal(kb4, (1, D_out_m), dtype=jnp.float32) * 0.1

    p_m = prepare_pipeline_params(w1_m, b1_m, w2_m, b2_m)   # bf16 default
    out_m = jax.block_until_ready(torch_pipeline_forward(x_m, p_m))
    ref_m = reference_forward(x_m, w1_m, b1_m, w2_m, b2_m, jnp.bfloat16)
    assert out_m.shape == (N_m, D_out_m)
    assert jnp.allclose(out_m, ref_m, atol=1e-2, rtol=1e-2), "medium bf16 mismatch"

    p_m32 = prepare_pipeline_params(w1_m, b1_m, w2_m, b2_m,
                                    compute_dtype=jnp.float32)
    out_m32 = jax.block_until_ready(torch_pipeline_forward(x_m, p_m32))
    ref_m32 = reference_forward(x_m, w1_m, b1_m, w2_m, b2_m, jnp.float32)
    assert jnp.allclose(out_m32, ref_m32, atol=3e-2, rtol=3e-2), "medium f32 mismatch"

    # TODO(synk): TorchPipeline.fit() is stateful per-module fitting with no
    # kernel-side equivalent; only forward() is implemented here.
    print("KERNEL_OK")
</pallas_src>

<mosaic_0001>
module attributes {stable_mosaic.version = 11 : i64} {
  func.func @_pipeline_kernel(%arg0: i32, %arg1: memref<16x128xf32, #tpu.memory_space<vmem>>, %arg2: memref<128x128xf32, #tpu.memory_space<vmem>>, %arg3: memref<1x128xf32, #tpu.memory_space<vmem>>, %arg4: memref<128x128xf32, #tpu.memory_space<vmem>>, %arg5: memref<1x128xf32, #tpu.memory_space<vmem>>, %arg6: memref<16x128xf32, #tpu.memory_space<vmem>>) attributes {dimension_semantics = [#tpu.dimension_semantics<parallel>], iteration_bounds = array<i64: 1>, scalar_prefetch = 0 : i64, scratch_operands = 0 : i64, tpu.core_type = #tpu.core_type<tc>, window_params = [{transform_indices = @transform_0, window_bounds = array<i64: 16, 128>}, {pipeline_mode = #tpu.pipeline_mode<synchronous>, transform_indices = @transform_1, window_bounds = array<i64: 128, 128>}, {pipeline_mode = #tpu.pipeline_mode<synchronous>, transform_indices = @transform_2, window_bounds = array<i64: 1, 128>}, {pipeline_mode = #tpu.pipeline_mode<synchronous>, transform_indices = @transform_3, window_bounds = array<i64: 128, 128>}, {pipeline_mode = #tpu.pipeline_mode<synchronous>, transform_indices = @transform_4, window_bounds = array<i64: 1, 128>}, {transform_indices = @transform_5, window_bounds = array<i64: 16, 128>}]} {
    %c0 = arith.constant 0 : index
    %c0_0 = arith.constant 0 : index
    %0 = vector.load %arg1[%c0, %c0_0] : memref<16x128xf32, #tpu.memory_space<vmem>>, vector<16x128xf32>
    %c0_1 = arith.constant 0 : index
    %c0_2 = arith.constant 0 : index
    %1 = vector.load %arg2[%c0_1, %c0_2] : memref<128x128xf32, #tpu.memory_space<vmem>>, vector<128x128xf32>
    %cst = arith.constant dense<0.000000e+00> : vector<16x128xf32>
    %2 = tpu.matmul %0, %1, %cst {dimension_numbers = #tpu.dot_dimension_numbers<[1], [0], [0], [1], [0, 0, 1, 1], [], []>} : vector<16x128xf32>, vector<128x128xf32>, vector<16x128xf32> -> vector<16x128xf32>
    %c0_3 = arith.constant 0 : index
    %c0_4 = arith.constant 0 : index
    %3 = vector.load %arg3[%c0_3, %c0_4] : memref<1x128xf32, #tpu.memory_space<vmem>>, vector<1x128xf32>
    %4 = vector.broadcast %3 : vector<1x128xf32> to vector<16x128xf32>
    %5 = arith.addf %2, %4 : vector<16x128xf32>
    %6 = math.tanh %5 : vector<16x128xf32>
    %c0_5 = arith.constant 0 : index
    %c0_6 = arith.constant 0 : index
    %7 = vector.load %arg4[%c0_5, %c0_6] : memref<128x128xf32, #tpu.memory_space<vmem>>, vector<128x128xf32>
    %cst_7 = arith.constant dense<0.000000e+00> : vector<16x128xf32>
    %8 = tpu.matmul %6, %7, %cst_7 {dimension_numbers = #tpu.dot_dimension_numbers<[1], [0], [0], [1], [0, 0, 1, 1], [], []>} : vector<16x128xf32>, vector<128x128xf32>, vector<16x128xf32> -> vector<16x128xf32>
    %c0_8 = arith.constant 0 : index
    %c0_9 = arith.constant 0 : index
    %9 = vector.load %arg5[%c0_8, %c0_9] : memref<1x128xf32, #tpu.memory_space<vmem>>, vector<1x128xf32>
    %10 = vector.broadcast %9 : vector<1x128xf32> to vector<16x128xf32>
    %11 = arith.addf %8, %10 : vector<16x128xf32>
    %c0_10 = arith.constant 0 : index
    %c0_11 = arith.constant 0 : index
    %12 = vector.load %arg6[%c0_10, %c0_11] : memref<16x128xf32, #tpu.memory_space<vmem>>, vector<16x128xf32>
    tpu.vector_store %arg6[%c0_10, %c0_11], %11 {strides = array<i32>} : memref<16x128xf32, #tpu.memory_space<vmem>>, vector<16x128xf32>,
    return
  }
  func.func @transform_0(%arg0: i32) -> (i32, i32) {
    %c0_i32 = arith.constant 0 : i32
    %c0_i32_0 = arith.constant 0 : i32
    return %arg0, %c0_i32 : i32, i32
  }
  func.func @transform_1(%arg0: i32) -> (i32, i32) {
    %c0_i32 = arith.constant 0 : i32
    %c0_i32_0 = arith.constant 0 : i32
    %c0_i32_1 = arith.constant 0 : i32
    return %c0_i32, %c0_i32_0 : i32, i32
  }
  func.func @transform_2(%arg0: i32) -> (i32, i32) {
    %c0_i32 = arith.constant 0 : i32
    %c0_i32_0 = arith.constant 0 : i32
    %c0_i32_1 = arith.constant 0 : i32
    return %c0_i32, %c0_i32_0 : i32, i32
  }
  func.func @transform_3(%arg0: i32) -> (i32, i32) {
    %c0_i32 = arith.constant 0 : i32
    %c0_i32_0 = arith.constant 0 : i32
    %c0_i32_1 = arith.constant 0 : i32
    return %c0_i32, %c0_i32_0 : i32, i32
  }
  func.func @transform_4(%arg0: i32) -> (i32, i32) {
    %c0_i32 = arith.constant 0 : i32
    %c0_i32_0 = arith.constant 0 : i32
    %c0_i32_1 = arith.constant 0 : i32
    return %c0_i32, %c0_i32_0 : i32, i32
  }
  func.func @transform_5(%arg0: i32) -> (i32, i32) {
    %c0_i32 = arith.constant 0 : i32
    %c0_i32_0 = arith.constant 0 : i32
    return %arg0, %c0_i32 : i32, i32
  }
}

module attributes {stable_mosaic.version = 11 : i64} {
  func.func @_pipeline_kernel(%arg0: i32, %arg1: memref<16x128xf32, #tpu.memory_space<vmem>>, %arg2: memref<128x128xf32, #tpu.memory_space<vmem>>, %arg3: memref<1x128xf32, #tpu.memory_space<vmem>>, %arg4: memref<128x128xf32, #tpu.memory_space<vmem>>, %arg5: memref<1x128xf32, #tpu.memory_space<vmem>>, %arg6: memref<16x128xf32, #tpu.memory_space<vmem>>) attributes {dimension_semantics = [#tpu.dimension_semantics<parallel>], iteration_bounds = array<i64: 1>, scalar_prefetch = 0 : i64, scratch_operands = 0 : i64, tpu.core_type = #tpu.core_type<tc>, window_params = [{transform_indices = @transform_0, window_bounds = array<i64: 16, 128>}, {pipeline_mode = #tpu.pipeline_mode<synchronous>, transform_indices = @transform_1, window_bounds = array<i64: 128, 128>}, {pipeline_mode = #tpu.pipeline_mode<synchronous>, transform_indices = @transform_2, window_bounds = array<i64: 1, 128>}, {pipeline_mode = #tpu.pipeline_mode<synchronous>, transform_indices = @transform_3, window_bounds = array<i64: 128, 128>}, {pipeline_mode = #tpu.pipeline_mode<synchronous>, transform_indices = @transform_4, window_bounds = array<i64: 1, 128>}, {transform_indices = @transform_5, window_bounds = array<i64: 16, 128>}]} {
    %c0 = arith.constant 0 : index
    %c0_0 = arith.constant 0 : index
    %0 = vector.load %arg1[%c0, %c0_0] : memref<16x128xf32, #tpu.memory_space<vmem>>, vector<16x128xf32>
    %c0_1 = arith.constant 0 : index
    %c0_2 = arith.constant 0 : index
    %1 = vector.load %arg2[%c0_1, %c0_2] : memref<128x128xf32, #tpu.memory_space<vmem>>, vector<128x128xf32>
    %cst = arith.constant dense<0.000000e+00> : vector<16x128xf32>
    %2 = tpu.matmul %0, %1, %cst {dimension_numbers = #tpu.dot_dimension_numbers<[1], [0], [0], [1], [0, 0, 1, 1], [], []>} : vector<16x128xf32>, vector<128x128xf32>, vector<16x128xf32> -> vector<16x128xf32>
    %c0_3 = arith.constant 0 : index
    %c0_4 = arith.constant 0 : index
    %3 = vector.load %arg3[%c0_3, %c0_4] : memref<1x128xf32, #tpu.memory_space<vmem>>, vector<1x128xf32>
    %4 = vector.broadcast %3 : vector<1x128xf32> to vector<16x128xf32>
    %5 = arith.addf %2, %4 : vector<16x128xf32>
    %6 = math.tanh %5 : vector<16x128xf32>
    %c0_5 = arith.constant 0 : index
    %c0_6 = arith.constant 0 : index
    %7 = vector.load %arg4[%c0_5, %c0_6] : memref<128x128xf32, #tpu.memory_space<vmem>>, vector<128x128xf32>
    %cst_7 = arith.constant dense<0.000000e+00> : vector<16x128xf32>
    %8 = tpu.matmul %6, %7, %cst_7 {dimension_numbers = #tpu.dot_dimension_numbers<[1], [0], [0], [1], [0, 0, 1, 1], [], []>} : vector<16x128xf32>, vector<128x128xf32>, vector<16x128xf32> -> vector<16x128xf32>
    %c0_8 = arith.constant 0 : index
    %c0_9 = arith.constant 0 : index
    %9 = vector.load %arg5[%c0_8, %c0_9] : memref<1x128xf32, #tpu.memory_space<vmem>>, vector<1x128xf32>
    %10 = vector.broadcast %9 : vector<1x128xf32> to vector<16x128xf32>
    %11 = arith.addf %8, %10 : vector<16x128xf32>
    %c0_10 = arith.constant 0 : index
    %c0_11 = arith.constant 0 : index
    %12 = vector.load %arg6[%c0_10, %c0_11] : memref<16x128xf32, #tpu.memory_space<vmem>>, vector<16x128xf32>
    tpu.vector_store %arg6[%c0_10, %c0_11], %11 {strides = array<i32>} : memref<16x128xf32, #tpu.memory_space<vmem>>, vector<16x128xf32>,
    return
  }
  func.func @transform_0(%arg0: i32) -> (i32, i32) {
    %c0_i32 = arith.constant 0 : i32
    %c0_i32_0 = arith.constant 0 : i32
    return %arg0, %c0_i32 : i32, i32
  }
  func.func @transform_1(%arg0: i32) -> (i32, i32) {
    %c0_i32 = arith.constant 0 : i32
    %c0_i32_0 = arith.constant 0 : i32
    %c0_i32_1 = arith.constant 0 : i32
    return %c0_i32, %c0_i32_0 : i32, i32
  }
  func.func @transform_2(%arg0: i32) -> (i32, i32) {
    %c0_i32 = arith.constant 0 : i32
    %c0_i32_0 = arith.constant 0 : i32
    %c0_i32_1 = arith.constant 0 : i32
    return %c0_i32, %c0_i32_0 : i32, i32
  }
  func.func @transform_3(%arg0: i32) -> (i32, i32) {
    %c0_i32 = arith.constant 0 : i32
    %c0_i32_0 = arith.constant 0 : i32
    %c0_i32_1 = arith.constant 0 : i32
    return %c0_i32, %c0_i32_0 : i32, i32
  }
  func.func @transform_4(%arg0: i32) -> (i32, i32) {
    %c0_i32 = arith.constant 0 : i32
    %c0_i32_0 = arith.constant 0 : i32
    %c0_i32_1 = arith.constant 0 : i32
    return %c0_i32, %c0_i32_0 : i32, i32
  }
  func.func @transform_5(%arg0: i32) -> (i32, i32) {
    %c0_i32 = arith.constant 0 : i32
    %c0_i32_0 = arith.constant 0 : i32
    return %arg0, %c0_i32 : i32, i32
  }
}

</mosaic_0001>

<llo_original>
// kernel: tpu_custom_call.1
$region0: #{tpu_custom_call.1}
  #allocation0 [shape = 'u32[]', space=smem, size = 0x4, offset = 0x4, fixed_abs, tag = 'smem constant byte address 0x4 - core index']
  #allocation1 [shape = 'u32[144,128]{1,0:T(1,128)}', space=vmem, size = 0x12000, scoped, tag = 'internal scratch']
  %s0 = inlined_call_operand.hbm [shape: f32[16,128], index: 0, kind: input, shape index: {}]
  %s1 = inlined_call_operand.hbm [shape: f32[128,128], index: 1, kind: input, shape index: {}]
  %s2 = inlined_call_operand.vmem [shape: f32[1,128], index: 2, kind: input, shape index: {}]
  %s3 = inlined_call_operand.hbm [shape: f32[128,128], index: 3, kind: input, shape index: {}]
  %s4 = inlined_call_operand.vmem [shape: f32[1,128], index: 4, kind: input, shape index: {}]
  %s5 = inlined_call_operand.hbm [shape: f32[16,128], index: 5, kind: output, shape index: {}]
  %s6 = sld [smem:[#allocation0]]
  $region42: #{tpu_custom_call.1} parent=0
    _
  %s8 = ssub.s32 1, %s6
  %s9 = scalar_select 0, %s8, %s6
  $region1: #{tpu_custom_call.1} parent=0
    #allocation2 [shape = 'u8[8192]{0}', space=vmem, size = 0x2000, scoped, tag = 'input window, operand 0, single buffered']
    #allocation3 [shape = 's32[1]{0}', space=sflag, size = 0x4, scoped, tag = 'scoped memory for tpu_custom_call.1']
    #allocation4 [shape = 's32[1]{0}', space=sflag, size = 0x4, scoped, tag = 'scoped memory for tpu_custom_call.1']
    #allocation5 [shape = 'u8[65536]{0}', space=vmem, size = 0x10000, scoped, tag = 'input window, operand 1, single buffered']
    #allocation6 [shape = 's32[1]{0}', space=sflag, size = 0x4, scoped, tag = 'scoped memory for tpu_custom_call.1']
    #allocation7 [shape = 'u8[65536]{0}', space=vmem, size = 0x10000, scoped, tag = 'input window, operand 3, single buffered']
    #allocation8 [shape = 'u8[8192]{0}', space=vmem, size = 0x2000, scoped, tag = 'output window, operand 0, single buffered']
    %10 = vsyncpa [#allocation3], 0
    %11 = vsyncpa [#allocation6], 0
    %12 = vsyncpa [#allocation4], 0
    // Predicated region
    $region2: #{tpu_custom_call.1} parent=1 // pred_check
      _
    $region3: #{tpu_custom_call.1} parent=1 // pred_check_branch
      %14 = sbr.rel (0) target = $region5
    $region4: #{tpu_custom_call.1} parent=1 // pred_region
      %s16 = ssub.s32 256, 256
      %17 = vsyncadd [#allocation3], %s16
      %s18 = sshll.u32 [#allocation2], 4
      %s19 = int_to_ptr.vmem [resolvable:$true] %s18
      %24 = dma.hbm_to_vmem [thread:$0]  %s0, 256, %s19, [#allocation3], 128, 128, 8
    $region5: #{tpu_custom_call.1} parent=1 // pred_fallthru
      _
    // Predicated region
    $region6: #{tpu_custom_call.1} parent=1 // pred_check
      _
    $region7: #{tpu_custom_call.1} parent=1 // pred_check_branch
      %26 = sbr.rel (0) target = $region9
    $region8: #{tpu_custom_call.1} parent=1 // pred_region
      %s28 = ssub.s32 2048, 2048
      %29 = vsyncadd [#allocation6], %s28
      %s30 = sshll.u32 [#allocation5], 4
      %s31 = int_to_ptr.vmem [resolvable:$true] %s30
      %36 = dma.hbm_to_vmem [thread:$0]  %s1, 2048, %s31, [#allocation6], 128, 128, 8
    $region9: #{tpu_custom_call.1} parent=1 // pred_fallthru
      _
    // Predicated region
    $region10: #{tpu_custom_call.1} parent=1 // pred_check
      _
    $region11: #{tpu_custom_call.1} parent=1 // pred_check_branch
      %38 = sbr.rel (0) target = $region13
    $region12: #{tpu_custom_call.1} parent=1 // pred_region
      _
    $region13: #{tpu_custom_call.1} parent=1 // pred_fallthru
      _
    // Predicated region
    $region14: #{tpu_custom_call.1} parent=1 // pred_check
      _
    $region15: #{tpu_custom_call.1} parent=1 // pred_check_branch
      %40 = sbr.rel (0) target = $region17
    $region16: #{tpu_custom_call.1} parent=1 // pred_region
      %s42 = ssub.s32 2048, 2048
      %43 = vsyncadd [#allocation6], %s42
      %s44 = sshll.u32 [#allocation7], 4
      %s45 = int_to_ptr.vmem [resolvable:$true] %s44
      %50 = dma.hbm_to_vmem [thread:$0]  %s3, 2048, %s45, [#allocation6], 128, 128, 8
    $region17: #{tpu_custom_call.1} parent=1 // pred_fallthru
      _
    // Predicated region
    $region18: #{tpu_custom_call.1} parent=1 // pred_check
      _
    $region19: #{tpu_custom_call.1} parent=1 // pred_check_branch
      %52 = sbr.rel (0) target = $region21
    $region20: #{tpu_custom_call.1} parent=1 // pred_region
      _
    $region21: #{tpu_custom_call.1} parent=1 // pred_fallthru
      _
    // Predicated region
    $region22: #{tpu_custom_call.1} parent=1 // pred_check
      _
    $region23: #{tpu_custom_call.1} parent=1 // pred_check_branch
      %54 = sbr.rel (0) target = $region25
    $region24: #{tpu_custom_call.1} parent=1 // pred_region
      %55 = dma.done [#allocation3], 256
    $region25: #{tpu_custom_call.1} parent=1 // pred_fallthru
      _
    // Predicated region
    $region26: #{tpu_custom_call.1} parent=1 // pred_check
      _
    $region27: #{tpu_custom_call.1} parent=1 // pred_check_branch
      %57 = sbr.rel (0) target = $region29
    $region28: #{tpu_custom_call.1} parent=1 // pred_region
      %58 = dma.done [#allocation6], 2048
    $region29: #{tpu_custom_call.1} parent=1 // pred_fallthru
      _
    // Predicated region
    $region30: #{tpu_custom_call.1} parent=1 // pred_check
      _
    $region31: #{tpu_custom_call.1} parent=1 // pred_check_branch
      %60 = sbr.rel (0) target = $region33
    $region32: #{tpu_custom_call.1} parent=1 // pred_region
      %61 = dma.done [#allocation6], 2048
    $region33: #{tpu_custom_call.1} parent=1 // pred_fallthru
      _
    %v62 = vld [vmem:[#allocation2] sm:$0xff]
    %v63 = vld [vmem:[#allocation2 + $0x8] sm:$0xff]
    %v64 = vld [vmem:[#allocation5] sm:$0xff]
    %v65 = vld [vmem:[#allocation5 + $0x8] sm:$0xff]
    %v66 = vld [vmem:[#allocation5 + $0x10] sm:$0xff]
    %v67 = vld [vmem:[#allocation5 + $0x18] sm:$0xff]
    %v68 = vld [vmem:[#allocation5 + $0x20] sm:$0xff]
    %v69 = vld [vmem:[#allocation5 + $0x28] sm:$0xff]
    %v70 = vld [vmem:[#allocation5 + $0x30] sm:$0xff]
    %v71 = vld [vmem:[#allocation5 + $0x38] sm:$0xff]
    %v72 = vld [vmem:[#allocation5 + $0x40] sm:$0xff]
    %v73 = vld [vmem:[#allocation5 + $0x48] sm:$0xff]
    %v74 = vld [vmem:[#allocation5 + $0x50] sm:$0xff]
    %v75 = vld [vmem:[#allocation5 + $0x58] sm:$0xff]
    %v76 = vld [vmem:[#allocation5 + $0x60] sm:$0xff]
    %v77 = vld [vmem:[#allocation5 + $0x68] sm:$0xff]
    %v78 = vld [vmem:[#allocation5 + $0x70] sm:$0xff]
    %v79 = vld [vmem:[#allocation5 + $0x78] sm:$0xff]
    %v80 = vld [vmem:[%s2] sm:$0x1]
    %v82 = vlaneseq
    %v83 = vshrl.u32 %v82, 7
    %v84 = vsub.s32 0, %v83
    %v85 = vrot.slane %v80, %v84
    %87 = vmatprep.subr.mxu0 0.0
    %88 = vmatpush1.msra.mxu0 %v79
    %89 = vmatprep.subr.mxu0 0.0
    %90 = vmatpush1.msra.mxu0 %v78
    %91 = vmatprep.subr.mxu0 0.0
    %92 = vmatpush1.msra.mxu0 %v77
    %93 = vmatprep.subr.mxu0 0.0
    %94 = vmatpush1.msra.mxu0 %v76
    %95 = vmatprep.subr.mxu0 0.0
    %96 = vmatpush1.msra.mxu0 %v75
    %97 = vmatprep.subr.mxu0 0.0
    %98 = vmatpush1.msra.mxu0 %v74
    %99 = vmatprep.subr.mxu0 0.0
    %100 = vmatpush1.msra.mxu0 %v73
    %101 = vmatprep.subr.mxu0 0.0
    %102 = vmatpush1.msra.mxu0 %v72
    %103 = vmatprep.subr.mxu0 0.0
    %104 = vmatpush1.msra.mxu0 %v71
    %105 = vmatprep.subr.mxu0 0.0
    %106 = vmatpush1.msra.mxu0 %v70
    %107 = vmatprep.subr.mxu0 0.0
    %108 = vmatpush1.msra.mxu0 %v69
    %109 = vmatprep.subr.mxu0 0.0
    %110 = vmatpush1.msra.mxu0 %v68
    %111 = vmatprep.subr.mxu0 0.0
    %112 = vmatpush1.msra.mxu0 %v67
    %113 = vmatprep.subr.mxu0 0.0
    %114 = vmatpush1.msra.mxu0 %v66
    %115 = vmatprep.subr.mxu0 0.0
    %116 = vmatpush1.msra.mxu0 %v65
    %117 = vmatprep.subr.mxu0 0.0
    %118 = vmatpush1.msra.mxu0 %v64
    %119 = vmatprep.subr.mxu0 0.0
    %120 = vmatpush2.msra.mxu0 0.0
    %121 = vmatprep.subr.mxu0 0.0
    %122 = vmatpush2.msra.mxu0 0.0
    %123 = vmatprep.subr.mxu0 0.0
    %124 = vmatpush2.msra.mxu0 0.0
    %125 = vmatprep.subr.mxu0 0.0
    %126 = vmatpush2.msra.mxu0 0.0
    %127 = vmatprep.subr.mxu0 0.0
    %128 = vmatpush2.msra.mxu0 0.0
    %129 = vmatprep.subr.mxu0 0.0
    %130 = vmatpush2.msra.mxu0 0.0
    %131 = vmatprep.subr.mxu0 0.0
    %132 = vmatpush2.msra.mxu0 0.0
    %133 = vmatprep.subr.mxu0 0.0
    %134 = vmatpush2.msra.mxu0 0.0
    %135 = vmatprep.subr.mxu0 0.0
    %136 = vmatpush2.msra.mxu0 0.0
    %137 = vmatprep.subr.mxu0 0.0
    %138 = vmatpush2.msra.mxu0 0.0
    %139 = vmatprep.subr.mxu0 0.0
    %140 = vmatpush2.msra.mxu0 0.0
    %141 = vmatprep.subr.mxu0 0.0
    %142 = vmatpush2.msra.mxu0 0.0
    %143 = vmatprep.subr.mxu0 0.0
    %144 = vmatpush2.msra.mxu0 0.0
    %145 = vmatprep.subr.mxu0 0.0
    %146 = vmatpush2.msra.mxu0 0.0
    %147 = vmatprep.subr.mxu0 0.0
    %148 = vmatpush2.msra.mxu0 0.0
    %149 = vmatprep.subr.mxu0 0.0
    %150 = vmatpush2.msra.mxu0 0.0
    %151 = vmatprep.mubr.f32.mxu0 0.0
    %152 = vmatmul.mubr.f32.gmra.mxu0 %v62
    %v153 = vpop.f32.mrf.mxu0
    %v154 = vadd.f32 %v85, %v153
    %v155 = vpop.f32.mrf.mxu0
    %156 = vmatprep.mubr.f32.mxu0 0.0
    %157 = vmatmul.mubr.f32.gmra.mxu0 %v63
    %v158 = vpop.f32.mrf.mxu0
    %v159 = vadd.f32 %v85, %v158
    %v160 = vpop.f32.mrf.mxu0
    %161 = vdwg.mxu0
    %v162 = vtanh.pop %v154
    %v163 = vtanh.pop %v159
    %v164 = vld [vmem:[#allocation7] sm:$0xff]
    %v165 = vld [vmem:[#allocation7 + $0x8] sm:$0xff]
    %v166 = vld [vmem:[#allocation7 + $0x10] sm:$0xff]
    %v167 = vld [vmem:[#allocation7 + $0x18] sm:$0xff]
    %v168 = vld [vmem:[#allocation7 + $0x20] sm:$0xff]
    %v169 = vld [vmem:[#allocation7 + $0x28] sm:$0xff]
    %v170 = vld [vmem:[#allocation7 + $0x30] sm:$0xff]
    %v171 = vld [vmem:[#allocation7 + $0x38] sm:$0xff]
    %v172 = vld [vmem:[#allocation7 + $0x40] sm:$0xff]
    %v173 = vld [vmem:[#allocation7 + $0x48] sm:$0xff]
    %v174 = vld [vmem:[#allocation7 + $0x50] sm:$0xff]
    %v175 = vld [vmem:[#allocation7 + $0x58] sm:$0xff]
    %v176 = vld [vmem:[#allocation7 + $0x60] sm:$0xff]
    %v177 = vld [vmem:[#allocation7 + $0x68] sm:$0xff]
    %v178 = vld [vmem:[#allocation7 + $0x70] sm:$0xff]
    %v179 = vld [vmem:[#allocation7 + $0x78] sm:$0xff]
    %v180 = vld [vmem:[%s4] sm:$0x1]
    %v182 = vlaneseq
    %v183 = vshrl.u32 %v182, 7
    %v184 = vsub.s32 0, %v183
    %v185 = vrot.slane %v180, %v184
    %187 = vmatprep.subr.mxu0 0.0
    %188 = vmatpush1.msra.mxu0 %v179
    %189 = vmatprep.subr.mxu0 0.0
    %190 = vmatpush1.msra.mxu0 %v178
    %191 = vmatprep.subr.mxu0 0.0
    %192 = vmatpush1.msra.mxu0 %v177
    %193 = vmatprep.subr.mxu0 0.0
    %194 = vmatpush1.msra.mxu0 %v176
    %195 = vmatprep.subr.mxu0 0.0
    %196 = vmatpush1.msra.mxu0 %v175
    %197 = vmatprep.subr.mxu0 0.0
    %198 = vmatpush1.msra.mxu0 %v174
    %199 = vmatprep.subr.mxu0 0.0
    %200 = vmatpush1.msra.mxu0 %v173
    %201 = vmatprep.subr.mxu0 0.0
    %202 = vmatpush1.msra.mxu0 %v172
    %203 = vmatprep.subr.mxu0 0.0
    %204 = vmatpush1.msra.mxu0 %v171
    %205 = vmatprep.subr.mxu0 0.0
    %206 = vmatpush1.msra.mxu0 %v170
    %207 = vmatprep.subr.mxu0 0.0
    %208 = vmatpush1.msra.mxu0 %v169
    %209 = vmatprep.subr.mxu0 0.0
    %210 = vmatpush1.msra.mxu0 %v168
    %211 = vmatprep.subr.mxu0 0.0
    %212 = vmatpush1.msra.mxu0 %v167
    %213 = vmatprep.subr.mxu0 0.0
    %214 = vmatpush1.msra.mxu0 %v166
    %215 = vmatprep.subr.mxu0 0.0
    %216 = vmatpush1.msra.mxu0 %v165
    %217 = vmatprep.subr.mxu0 0.0
    %218 = vmatpush1.msra.mxu0 %v164
    %219 = vmatprep.subr.mxu0 0.0
    %220 = vmatpush2.msra.mxu0 0.0
    %221 = vmatprep.subr.mxu0 0.0
    %222 = vmatpush2.msra.mxu0 0.0
    %223 = vmatprep.subr.mxu0 0.0
    %224 = vmatpush2.msra.mxu0 0.0
    %225 = vmatprep.subr.mxu0 0.0
    %226 = vmatpush2.msra.mxu0 0.0
    %227 = vmatprep.subr.mxu0 0.0
    %228 = vmatpush2.msra.mxu0 0.0
    %229 = vmatprep.subr.mxu0 0.0
    %230 = vmatpush2.msra.mxu0 0.0
    %231 = vmatprep.subr.mxu0 0.0
    %232 = vmatpush2.msra.mxu0 0.0
    %233 = vmatprep.subr.mxu0 0.0
    %234 = vmatpush2.msra.mxu0 0.0
    %235 = vmatprep.subr.mxu0 0.0
    %236 = vmatpush2.msra.mxu0 0.0
    %237 = vmatprep.subr.mxu0 0.0
    %238 = vmatpush2.msra.mxu0 0.0
    %239 = vmatprep.subr.mxu0 0.0
    %240 = vmatpush2.msra.mxu0 0.0
    %241 = vmatprep.subr.mxu0 0.0
    %242 = vmatpush2.msra.mxu0 0.0
    %243 = vmatprep.subr.mxu0 0.0
    %244 = vmatpush2.msra.mxu0 0.0
    %245 = vmatprep.subr.mxu0 0.0
    %246 = vmatpush2.msra.mxu0 0.0
    %247 = vmatprep.subr.mxu0 0.0
    %248 = vmatpush2.msra.mxu0 0.0
    %249 = vmatprep.subr.mxu0 0.0
    %250 = vmatpush2.msra.mxu0 0.0
    %251 = vmatprep.mubr.f32.mxu0 0.0
    %252 = vmatmul.mubr.f32.gmra.mxu0 %v162
    %v253 = vpop.f32.mrf.mxu0
    %v254 = vadd.f32 %v185, %v253
    %v255 = vpop.f32.mrf.mxu0
    %256 = vmatprep.mubr.f32.mxu0 0.0
    %257 = vmatmul.mubr.f32.gmra.mxu0 %v163
    %v258 = vpop.f32.mrf.mxu0
    %v259 = vadd.f32 %v185, %v258
    %v260 = vpop.f32.mrf.mxu0
    %261 = vdwg.mxu0
    %262 = vst [vmem:[#allocation8] sm:$0xff] %v254
    %263 = vst [vmem:[#allocation8 + $0x8] sm:$0xff] %v259
    // Predicated region
    $region34: #{tpu_custom_call.1} parent=1 // pred_check
      _
    $region35: #{tpu_custom_call.1} parent=1 // pred_check_branch
      %265 = sbr.rel (0) target = $region37
    $region36: #{tpu_custom_call.1} parent=1 // pred_region
      %s267 = ssub.s32 256, 256
      %268 = vsyncadd [#allocation4], %s267
      %s269 = sshll.u32 [#allocation8], 4
      %s270 = int_to_ptr.vmem [resolvable:$true] %s269
      %275 = dma.vmem_to_hbm [thread:$0]  %s270, 256, %s5, [#allocation4], 128, 128, 8
    $region37: #{tpu_custom_call.1} parent=1 // pred_fallthru
      _
    // Predicated region
    $region38: #{tpu_custom_call.1} parent=1 // pred_check
      _
    $region39: #{tpu_custom_call.1} parent=1 // pred_check_branch
      %277 = sbr.rel (0) target = $region41
    $region40: #{tpu_custom_call.1} parent=1 // pred_region
      %278 = dma.done [#allocation4], 256
    $region41: #{tpu_custom_call.1} parent=1 // pred_fallthru
      _
    %279 = vsyncpa [#allocation3], 1
    %280 = vsyncpa [#allocation6], 1
    %281 = vsyncpa [#allocation4], 1

// kernel: tpu_custom_call.1
$region0: #{tpu_custom_call.1}
  #allocation0 [shape = 'u32[]', space=smem, size = 0x4, offset = 0x4, fixed_abs, tag = 'smem constant byte address 0x4 - core index']
  #allocation1 [shape = 'u32[144,128]{1,0:T(1,128)}', space=vmem, size = 0x12000, scoped, tag = 'internal scratch']
  %s0 = inlined_call_operand.hbm [shape: f32[16,128], index: 0, kind: input, shape index: {}]
  %s1 = inlined_call_operand.hbm [shape: f32[128,128], index: 1, kind: input, shape index: {}]
  %s2 = inlined_call_operand.vmem [shape: f32[1,128], index: 2, kind: input, shape index: {}]
  %s3 = inlined_call_operand.hbm [shape: f32[128,128], index: 3, kind: input, shape index: {}]
  %s4 = inlined_call_operand.vmem [shape: f32[1,128], index: 4, kind: input, shape index: {}]
  %s5 = inlined_call_operand.hbm [shape: f32[16,128], index: 5, kind: output, shape index: {}]
  %s6 = sld [smem:[#allocation0]]
  $region42: #{tpu_custom_call.1} parent=0
    _
  %s8 = ssub.s32 1, %s6
  %s9 = scalar_select 0, %s8, %s6
  $region1: #{tpu_custom_call.1} parent=0
    #allocation2 [shape = 'u8[8192]{0}', space=vmem, size = 0x2000, scoped, tag = 'input window, operand 0, single buffered']
    #allocation3 [shape = 's32[1]{0}', space=sflag, size = 0x4, scoped, tag = 'scoped memory for tpu_custom_call.1']
    #allocation4 [shape = 's32[1]{0}', space=sflag, size = 0x4, scoped, tag = 'scoped memory for tpu_custom_call.1']
    #allocation5 [shape = 'u8[65536]{0}', space=vmem, size = 0x10000, scoped, tag = 'input window, operand 1, single buffered']
    #allocation6 [shape = 's32[1]{0}', space=sflag, size = 0x4, scoped, tag = 'scoped memory for tpu_custom_call.1']
    #allocation7 [shape = 'u8[65536]{0}', space=vmem, size = 0x10000, scoped, tag = 'input window, operand 3, single buffered']
    #allocation8 [shape = 'u8[8192]{0}', space=vmem, size = 0x2000, scoped, tag = 'output window, operand 0, single buffered']
    %10 = vsyncpa [#allocation3], 0
    %11 = vsyncpa [#allocation6], 0
    %12 = vsyncpa [#allocation4], 0
    // Predicated region
    $region2: #{tpu_custom_call.1} parent=1 // pred_check
      _
    $region3: #{tpu_custom_call.1} parent=1 // pred_check_branch
      %14 = sbr.rel (0) target = $region5
    $region4: #{tpu_custom_call.1} parent=1 // pred_region
      %s16 = ssub.s32 256, 256
      %17 = vsyncadd [#allocation3], %s16
      %s18 = sshll.u32 [#allocation2], 4
      %s19 = int_to_ptr.vmem [resolvable:$true] %s18
      %24 = dma.hbm_to_vmem [thread:$0]  %s0, 256, %s19, [#allocation3], 128, 128, 8
    $region5: #{tpu_custom_call.1} parent=1 // pred_fallthru
      _
    // Predicated region
    $region6: #{tpu_custom_call.1} parent=1 // pred_check
      _
    $region7: #{tpu_custom_call.1} parent=1 // pred_check_branch
      %26 = sbr.rel (0) target = $region9
    $region8: #{tpu_custom_call.1} parent=1 // pred_region
      %s28 = ssub.s32 2048, 2048
      %29 = vsyncadd [#allocation6], %s28
      %s30 = sshll.u32 [#allocation5], 4
      %s31 = int_to_ptr.vmem [resolvable:$true] %s30
      %36 = dma.hbm_to_vmem [thread:$0]  %s1, 2048, %s31, [#allocation6], 128, 128, 8
    $region9: #{tpu_custom_call.1} parent=1 // pred_fallthru
      _
    // Predicated region
    $region10: #{tpu_custom_call.1} parent=1 // pred_check
      _
    $region11: #{tpu_custom_call.1} parent=1 // pred_check_branch
      %38 = sbr.rel (0) target = $region13
    $region12: #{tpu_custom_call.1} parent=1 // pred_region
      _
    $region13: #{tpu_custom_call.1} parent=1 // pred_fallthru
      _
    // Predicated region
    $region14: #{tpu_custom_call.1} parent=1 // pred_check
      _
    $region15: #{tpu_custom_call.1} parent=1 // pred_check_branch
      %40 = sbr.rel (0) target = $region17
    $region16: #{tpu_custom_call.1} parent=1 // pred_region
      %s42 = ssub.s32 2048, 2048
      %43 = vsyncadd [#allocation6], %s42
      %s44 = sshll.u32 [#allocation7], 4
      %s45 = int_to_ptr.vmem [resolvable:$true] %s44
      %50 = dma.hbm_to_vmem [thread:$0]  %s3, 2048, %s45, [#allocation6], 128, 128, 8
    $region17: #{tpu_custom_call.1} parent=1 // pred_fallthru
      _
    // Predicated region
    $region18: #{tpu_custom_call.1} parent=1 // pred_check
      _
    $region19: #{tpu_custom_call.1} parent=1 // pred_check_branch
      %52 = sbr.rel (0) target = $region21
    $region20: #{tpu_custom_call.1} parent=1 // pred_region
      _
    $region21: #{tpu_custom_call.1} parent=1 // pred_fallthru
      _
    // Predicated region
    $region22: #{tpu_custom_call.1} parent=1 // pred_check
      _
    $region23: #{tpu_custom_call.1} parent=1 // pred_check_branch
      %54 = sbr.rel (0) target = $region25
    $region24: #{tpu_custom_call.1} parent=1 // pred_region
      %55 = dma.done [#allocation3], 256
    $region25: #{tpu_custom_call.1} parent=1 // pred_fallthru
      _
    // Predicated region
    $region26: #{tpu_custom_call.1} parent=1 // pred_check
      _
    $region27: #{tpu_custom_call.1} parent=1 // pred_check_branch
      %57 = sbr.rel (0) target = $region29
    $region28: #{tpu_custom_call.1} parent=1 // pred_region
      %58 = dma.done [#allocation6], 2048
    $region29: #{tpu_custom_call.1} parent=1 // pred_fallthru
      _
    // Predicated region
    $region30: #{tpu_custom_call.1} parent=1 // pred_check
      _
    $region31: #{tpu_custom_call.1} parent=1 // pred_check_branch
      %60 = sbr.rel (0) target = $region33
    $region32: #{tpu_custom_call.1} parent=1 // pred_region
      %61 = dma.done [#allocation6], 2048
    $region33: #{tpu_custom_call.1} parent=1 // pred_fallthru
      _
    %v62 = vld [vmem:[#allocation2] sm:$0xff]
    %v63 = vld [vmem:[#allocation2 + $0x8] sm:$0xff]
    %v64 = vld [vmem:[#allocation5] sm:$0xff]
    %v65 = vld [vmem:[#allocation5 + $0x8] sm:$0xff]
    %v66 = vld [vmem:[#allocation5 + $0x10] sm:$0xff]
    %v67 = vld [vmem:[#allocation5 + $0x18] sm:$0xff]
    %v68 = vld [vmem:[#allocation5 + $0x20] sm:$0xff]
    %v69 = vld [vmem:[#allocation5 + $0x28] sm:$0xff]
    %v70 = vld [vmem:[#allocation5 + $0x30] sm:$0xff]
    %v71 = vld [vmem:[#allocation5 + $0x38] sm:$0xff]
    %v72 = vld [vmem:[#allocation5 + $0x40] sm:$0xff]
    %v73 = vld [vmem:[#allocation5 + $0x48] sm:$0xff]
    %v74 = vld [vmem:[#allocation5 + $0x50] sm:$0xff]
    %v75 = vld [vmem:[#allocation5 + $0x58] sm:$0xff]
    %v76 = vld [vmem:[#allocation5 + $0x60] sm:$0xff]
    %v77 = vld [vmem:[#allocation5 + $0x68] sm:$0xff]
    %v78 = vld [vmem:[#allocation5 + $0x70] sm:$0xff]
    %v79 = vld [vmem:[#allocation5 + $0x78] sm:$0xff]
    %v80 = vld [vmem:[%s2] sm:$0x1]
    %v82 = vlaneseq
    %v83 = vshrl.u32 %v82, 7
    %v84 = vsub.s32 0, %v83
    %v85 = vrot.slane %v80, %v84
    %87 = vmatprep.subr.mxu0 0.0
    %88 = vmatpush1.msra.mxu0 %v79
    %89 = vmatprep.subr.mxu0 0.0
    %90 = vmatpush1.msra.mxu0 %v78
    %91 = vmatprep.subr.mxu0 0.0
    %92 = vmatpush1.msra.mxu0 %v77
    %93 = vmatprep.subr.mxu0 0.0
    %94 = vmatpush1.msra.mxu0 %v76
    %95 = vmatprep.subr.mxu0 0.0
    %96 = vmatpush1.msra.mxu0 %v75
    %97 = vmatprep.subr.mxu0 0.0
    %98 = vmatpush1.msra.mxu0 %v74
    %99 = vmatprep.subr.mxu0 0.0
    %100 = vmatpush1.msra.mxu0 %v73
    %101 = vmatprep.subr.mxu0 0.0
    %102 = vmatpush1.msra.mxu0 %v72
    %103 = vmatprep.subr.mxu0 0.0
    %104 = vmatpush1.msra.mxu0 %v71
    %105 = vmatprep.subr.mxu0 0.0
    %106 = vmatpush1.msra.mxu0 %v70
    %107 = vmatprep.subr.mxu0 0.0
    %108 = vmatpush1.msra.mxu0 %v69
    %109 = vmatprep.subr.mxu0 0.0
    %110 = vmatpush1.msra.mxu0 %v68
    %111 = vmatprep.subr.mxu0 0.0
    %112 = vmatpush1.msra.mxu0 %v67
    %113 = vmatprep.subr.mxu0 0.0
    %114 = vmatpush1.msra.mxu0 %v66
    %115 = vmatprep.subr.mxu0 0.0
    %116 = vmatpush1.msra.mxu0 %v65
    %117 = vmatprep.subr.mxu0 0.0
    %118 = vmatpush1.msra.mxu0 %v64
    %119 = vmatprep.subr.mxu0 0.0
    %120 = vmatpush2.msra.mxu0 0.0
    %121 = vmatprep.subr.mxu0 0.0
    %122 = vmatpush2.msra.mxu0 0.0
    %123 = vmatprep.subr.mxu0 0.0
    %124 = vmatpush2.msra.mxu0 0.0
    %125 = vmatprep.subr.mxu0 0.0
    %126 = vmatpush2.msra.mxu0 0.0
    %127 = vmatprep.subr.mxu0 0.0
    %128 = vmatpush2.msra.mxu0 0.0
    %129 = vmatprep.subr.mxu0 0.0
    %130 = vmatpush2.msra.mxu0 0.0
    %131 = vmatprep.subr.mxu0 0.0
    %132 = vmatpush2.msra.mxu0 0.0
    %133 = vmatprep.subr.mxu0 0.0
    %134 = vmatpush2.msra.mxu0 0.0
    %135 = vmatprep.subr.mxu0 0.0
    %136 = vmatpush2.msra.mxu0 0.0
    %137 = vmatprep.subr.mxu0 0.0
    %138 = vmatpush2.msra.mxu0 0.0
    %139 = vmatprep.subr.mxu0 0.0
    %140 = vmatpush2.msra.mxu0 0.0
    %141 = vmatprep.subr.mxu0 0.0
    %142 = vmatpush2.msra.mxu0 0.0
    %143 = vmatprep.subr.mxu0 0.0
    %144 = vmatpush2.msra.mxu0 0.0
    %145 = vmatprep.subr.mxu0 0.0
    %146 = vmatpush2.msra.mxu0 0.0
    %147 = vmatprep.subr.mxu0 0.0
    %148 = vmatpush2.msra.mxu0 0.0
    %149 = vmatprep.subr.mxu0 0.0
    %150 = vmatpush2.msra.mxu0 0.0
    %151 = vmatprep.mubr.f32.mxu0 0.0
    %152 = vmatmul.mubr.f32.gmra.mxu0 %v62
    %v153 = vpop.f32.mrf.mxu0
    %v154 = vadd.f32 %v85, %v153
    %v155 = vpop.f32.mrf.mxu0
    %156 = vmatprep.mubr.f32.mxu0 0.0
    %157 = vmatmul.mubr.f32.gmra.mxu0 %v63
    %v158 = vpop.f32.mrf.mxu0
    %v159 = vadd.f32 %v85, %v158
    %v160 = vpop.f32.mrf.mxu0
    %161 = vdwg.mxu0
    %v162 = vtanh.pop %v154
    %v163 = vtanh.pop %v159
    %v164 = vld [vmem:[#allocation7] sm:$0xff]
    %v165 = vld [vmem:[#allocation7 + $0x8] sm:$0xff]
    %v166 = vld [vmem:[#allocation7 + $0x10] sm:$0xff]
    %v167 = vld [vmem:[#allocation7 + $0x18] sm:$0xff]
    %v168 = vld [vmem:[#allocation7 + $0x20] sm:$0xff]
    %v169 = vld [vmem:[#allocation7 + $0x28] sm:$0xff]
    %v170 = vld [vmem:[#allocation7 + $0x30] sm:$0xff]
    %v171 = vld [vmem:[#allocation7 + $0x38] sm:$0xff]
    %v172 = vld [vmem:[#allocation7 + $0x40] sm:$0xff]
    %v173 = vld [vmem:[#allocation7 + $0x48] sm:$0xff]
    %v174 = vld [vmem:[#allocation7 + $0x50] sm:$0xff]
    %v175 = vld [vmem:[#allocation7 + $0x58] sm:$0xff]
    %v176 = vld [vmem:[#allocation7 + $0x60] sm:$0xff]
    %v177 = vld [vmem:[#allocation7 + $0x68] sm:$0xff]
    %v178 = vld [vmem:[#allocation7 + $0x70] sm:$0xff]
    %v179 = vld [vmem:[#allocation7 + $0x78] sm:$0xff]
    %v180 = vld [vmem:[%s4] sm:$0x1]
    %v182 = vlaneseq
    %v183 = vshrl.u32 %v182, 7
    %v184 = vsub.s32 0, %v183
    %v185 = vrot.slane %v180, %v184
    %187 = vmatprep.subr.mxu0 0.0
    %188 = vmatpush1.msra.mxu0 %v179
    %189 = vmatprep.subr.mxu0 0.0
    %190 = vmatpush1.msra.mxu0 %v178
    %191 = vmatprep.subr.mxu0 0.0
    %192 = vmatpush1.msra.mxu0 %v177
    %193 = vmatprep.subr.mxu0 0.0
    %194 = vmatpush1.msra.mxu0 %v176
    %195 = vmatprep.subr.mxu0 0.0
    %196 = vmatpush1.msra.mxu0 %v175
    %197 = vmatprep.subr.mxu0 0.0
    %198 = vmatpush1.msra.mxu0 %v174
    %199 = vmatprep.subr.mxu0 0.0
    %200 = vmatpush1.msra.mxu0 %v173
    %201 = vmatprep.subr.mxu0 0.0
    %202 = vmatpush1.msra.mxu0 %v172
    %203 = vmatprep.subr.mxu0 0.0
    %204 = vmatpush1.msra.mxu0 %v171
    %205 = vmatprep.subr.mxu0 0.0
    %206 = vmatpush1.msra.mxu0 %v170
    %207 = vmatprep.subr.mxu0 0.0
    %208 = vmatpush1.msra.mxu0 %v169
    %209 = vmatprep.subr.mxu0 0.0
    %210 = vmatpush1.msra.mxu0 %v168
    %211 = vmatprep.subr.mxu0 0.0
    %212 = vmatpush1.msra.mxu0 %v167
    %213 = vmatprep.subr.mxu0 0.0
    %214 = vmatpush1.msra.mxu0 %v166
    %215 = vmatprep.subr.mxu0 0.0
    %216 = vmatpush1.msra.mxu0 %v165
    %217 = vmatprep.subr.mxu0 0.0
    %218 = vmatpush1.msra.mxu0 %v164
    %219 = vmatprep.subr.mxu0 0.0
    %220 = vmatpush2.msra.mxu0 0.0
    %221 = vmatprep.subr.mxu0 0.0
    %222 = vmatpush2.msra.mxu0 0.0
    %223 = vmatprep.subr.mxu0 0.0
    %224 = vmatpush2.msra.mxu0 0.0
    %225 = vmatprep.subr.mxu0 0.0
    %226 = vmatpush2.msra.mxu0 0.0
    %227 = vmatprep.subr.mxu0 0.0
    %228 = vmatpush2.msra.mxu0 0.0
    %229 = vmatprep.subr.mxu0 0.0
    %230 = vmatpush2.msra.mxu0 0.0
    %231 = vmatprep.subr.mxu0 0.0
    %232 = vmatpush2.msra.mxu0 0.0
    %233 = vmatprep.subr.mxu0 0.0
    %234 = vmatpush2.msra.mxu0 0.0
    %235 = vmatprep.subr.mxu0 0.0
    %236 = vmatpush2.msra.mxu0 0.0
    %237 = vmatprep.subr.mxu0 0.0
    %238 = vmatpush2.msra.mxu0 0.0
    %239 = vmatprep.subr.mxu0 0.0
    %240 = vmatpush2.msra.mxu0 0.0
    %241 = vmatprep.subr.mxu0 0.0
    %242 = vmatpush2.msra.mxu0 0.0
    %243 = vmatprep.subr.mxu0 0.0
    %244 = vmatpush2.msra.mxu0 0.0
    %245 = vmatprep.subr.mxu0 0.0
    %246 = vmatpush2.msra.mxu0 0.0
    %247 = vmatprep.subr.mxu0 0.0
    %248 = vmatpush2.msra.mxu0 0.0
    %249 = vmatprep.subr.mxu0 0.0
    %250 = vmatpush2.msra.mxu0 0.0
    %251 = vmatprep.mubr.f32.mxu0 0.0
    %252 = vmatmul.mubr.f32.gmra.mxu0 %v162
    %v253 = vpop.f32.mrf.mxu0
    %v254 = vadd.f32 %v185, %v253
    %v255 = vpop.f32.mrf.mxu0
    %256 = vmatprep.mubr.f32.mxu0 0.0
    %257 = vmatmul.mubr.f32.gmra.mxu0 %v163
    %v258 = vpop.f32.mrf.mxu0
    %v259 = vadd.f32 %v185, %v258
    %v260 = vpop.f32.mrf.mxu0
    %261 = vdwg.mxu0
    %262 = vst [vmem:[#allocation8] sm:$0xff] %v254
    %263 = vst [vmem:[#allocation8 + $0x8] sm:$0xff] %v259
    // Predicated region
    $region34: #{tpu_custom_call.1} parent=1 // pred_check
      _
    $region35: #{tpu_custom_call.1} parent=1 // pred_check_branch
      %265 = sbr.rel (0) target = $region37
    $region36: #{tpu_custom_call.1} parent=1 // pred_region
      %s267 = ssub.s32 256, 256
      %268 = vsyncadd [#allocation4], %s267
      %s269 = sshll.u32 [#allocation8], 4
      %s270 = int_to_ptr.vmem [resolvable:$true] %s269
      %275 = dma.vmem_to_hbm [thread:$0]  %s270, 256, %s5, [#allocation4], 128, 128, 8
    $region37: #{tpu_custom_call.1} parent=1 // pred_fallthru
      _
    // Predicated region
    $region38: #{tpu_custom_call.1} parent=1 // pred_check
      _
    $region39: #{tpu_custom_call.1} parent=1 // pred_check_branch
      %277 = sbr.rel (0) target = $region41
    $region40: #{tpu_custom_call.1} parent=1 // pred_region
      %278 = dma.done [#allocation4], 256
    $region41: #{tpu_custom_call.1} parent=1 // pred_fallthru
      _
    %279 = vsyncpa [#allocation3], 1
    %280 = vsyncpa [#allocation6], 1
    %281 = vsyncpa [#allocation4], 1

</llo_original>
